<compile_context>
chip_gen: v5e
topology: v5e:2x2
jax: 0.10.0
libtpu: 0.0.40
codegen_flags: <defaults>
</compile_context>

<pallas_src>
from functools import partial

import jax
import jax.numpy as jnp
from jax.experimental import pallas as pl
from jax.experimental.pallas import tpu as pltpu

LANES = 128
MAX_BLOCK_ROWS = 8192  # 8192 x 128 x 4B = 4 MiB per f32 block
SUBLANES = 8


def _custom_layer_kernel(x_ref, o_ref, *, k):
    x = x_ref[...]
    # NaN -> 0, +Inf -> 1e10, -Inf -> -1e10 (matches the torch.where reference)
    x = jnp.nan_to_num(x, nan=0.0, posinf=1e10, neginf=-1e10)
    o_ref[...] = x * jnp.tanh(k * x)


@partial(jax.jit, static_argnames=("k",))
def custom_layer(x, k):
    """Elementwise CustomLayer forward. x: any-shape float array."""
    orig_shape = x.shape
    orig_dtype = x.dtype
    total = x.size

    # Flatten to a lane-dense 2D slab (rows, 128).
    rows_min = pl.cdiv(total, LANES)

    # Pick the number of blocks so each block is as large as possible
    # (<= MAX_BLOCK_ROWS) while keeping pad waste < SUBLANES rows / block.
    num_blocks = pl.cdiv(rows_min, MAX_BLOCK_ROWS)
    block_rows = pl.cdiv(pl.cdiv(rows_min, num_blocks), SUBLANES) * SUBLANES
    rows = num_blocks * block_rows

    padded = rows * LANES
    x_flat = jnp.ravel(x)
    if padded != total:
        # Only materialize padding when the shape actually needs it.
        x_flat = jnp.pad(x_flat, (0, padded - total))
    x2d = x_flat.reshape(rows, LANES)

    out2d = pl.pallas_call(
        partial(_custom_layer_kernel, k=float(k)),
        out_shape=jax.ShapeDtypeStruct((rows, LANES), orig_dtype),
        grid_spec=pltpu.PrefetchScalarGridSpec(
            num_scalar_prefetch=0,
            grid=(num_blocks,),
            in_specs=[
                pl.BlockSpec((block_rows, LANES), lambda i: (i, 0)),
            ],
            out_specs=pl.BlockSpec((block_rows, LANES), lambda i: (i, 0)),
        ),
        compiler_params=pltpu.CompilerParams(
            dimension_semantics=("parallel",),
        ),
    )(x2d)

    out_flat = out2d.reshape(-1)
    if padded != total:
        out_flat = out_flat[:total]
    return out_flat.reshape(orig_shape)


if __name__ == "__main__":
    key = jax.random.PRNGKey(0)
    B, C, H, W = 2, 4, 16, 16
    x = jax.random.normal(key, (B, C, H, W), dtype=jnp.float32)
    # Inject some NaN / Inf values to exercise the cleaning path.
    x = x.at[0, 0, 0, 0].set(jnp.nan)
    x = x.at[0, 1, 2, 3].set(jnp.inf)
    x = x.at[1, 2, 4, 5].set(-jnp.inf)

    k = 0.5

    y = custom_layer(x, k)
    y = jax.block_until_ready(y)

    # Reference check in plain JAX (mirrors the PyTorch forward).
    xc = jnp.where(jnp.isnan(x), jnp.zeros_like(x), x)
    xc = jnp.where(jnp.isinf(xc), jnp.sign(xc) * 1e10, xc)
    ref = xc * jnp.tanh(k * xc)

    assert y.shape == x.shape and y.dtype == x.dtype
    assert jnp.allclose(y, ref, rtol=1e-6, atol=1e-6)

    print("KERNEL_OK")
</pallas_src>

<mosaic_0001>
module attributes {stable_mosaic.version = 11 : i64} {
  func.func @_custom_layer_kernel(%arg0: i32, %arg1: memref<16x128xf32, #tpu.memory_space<vmem>>, %arg2: memref<16x128xf32, #tpu.memory_space<vmem>>) attributes {dimension_semantics = [#tpu.dimension_semantics<parallel>], iteration_bounds = array<i64: 1>, scalar_prefetch = 0 : i64, scratch_operands = 0 : i64, tpu.core_type = #tpu.core_type<tc>, window_params = [{transform_indices = @transform_0, window_bounds = array<i64: 16, 128>}, {transform_indices = @transform_1, window_bounds = array<i64: 16, 128>}]} {
    %c0 = arith.constant 0 : index
    %c0_0 = arith.constant 0 : index
    %0 = vector.load %arg1[%c0, %c0_0] : memref<16x128xf32, #tpu.memory_space<vmem>>, vector<16x128xf32>
    %cst = arith.constant 0.000000e+00 : f32
    %cst_1 = arith.constant -1.000000e+10 : f32
    %cst_2 = arith.constant 1.000000e+10 : f32
    %1 = arith.cmpf one, %0, %0 : vector<16x128xf32>
    %2 = vector.broadcast %cst : f32 to vector<16x128xf32>
    %3 = arith.select %1, %2, %0 : vector<16x128xi1>, vector<16x128xf32>
    %cst_3 = arith.constant 0x7F800000 : f32
    %4 = vector.broadcast %cst_3 : f32 to vector<16x128xf32>
    %5 = arith.cmpf oeq, %3, %4 : vector<16x128xf32>
    %6 = vector.broadcast %cst_2 : f32 to vector<16x128xf32>
    %7 = arith.select %5, %6, %3 : vector<16x128xi1>, vector<16x128xf32>
    %cst_4 = arith.constant 0xFF800000 : f32
    %8 = vector.broadcast %cst_4 : f32 to vector<16x128xf32>
    %9 = arith.cmpf oeq, %7, %8 : vector<16x128xf32>
    %10 = vector.broadcast %cst_1 : f32 to vector<16x128xf32>
    %11 = arith.select %9, %10, %7 : vector<16x128xi1>, vector<16x128xf32>
    %cst_5 = arith.constant 5.000000e-01 : f32
    %12 = vector.broadcast %cst_5 : f32 to vector<16x128xf32>
    %13 = arith.mulf %12, %11 : vector<16x128xf32>
    %14 = math.tanh %13 : vector<16x128xf32>
    %15 = arith.mulf %11, %14 : vector<16x128xf32>
    %c0_6 = arith.constant 0 : index
    %c0_7 = arith.constant 0 : index
    %16 = vector.load %arg2[%c0_6, %c0_7] : memref<16x128xf32, #tpu.memory_space<vmem>>, vector<16x128xf32>
    tpu.vector_store %arg2[%c0_6, %c0_7], %15 {strides = array<i32>} : memref<16x128xf32, #tpu.memory_space<vmem>>, vector<16x128xf32>,
    return
  }
  func.func @transform_0(%arg0: i32) -> (i32, i32) {
    %c0_i32 = arith.constant 0 : i32
    %c0_i32_0 = arith.constant 0 : i32
    return %arg0, %c0_i32 : i32, i32
  }
  func.func @transform_1(%arg0: i32) -> (i32, i32) {
    %c0_i32 = arith.constant 0 : i32
    %c0_i32_0 = arith.constant 0 : i32
    return %arg0, %c0_i32 : i32, i32
  }
}

</mosaic_0001>

<llo_original>
// kernel: custom_layer.1
$region0: #{custom_layer.1}
  #allocation0 [shape = 'u32[]', space=smem, size = 0x4, offset = 0x4, fixed_abs, tag = 'smem constant byte address 0x4 - core index']
  #allocation1 [shape = 'u32[72,128]{1,0:T(1,128)}', space=vmem, size = 0x9000, scoped, tag = 'internal scratch']
  %s0 = inlined_call_operand.vmem [shape: f32[16,128], index: 0, kind: input, shape index: {}]
  %s1 = inlined_call_operand.vmem [shape: f32[16,128], index: 1, kind: output, shape index: {}]
  %s2 = sld [smem:[#allocation0]]
  $region14: #{custom_layer.1} parent=0
    _
  %s4 = ssub.s32 1, %s2
  %s5 = scalar_select 0, %s4, %s2
  // Predicated region
  $region2: #{custom_layer.1} parent=0 // pred_check
    _
  $region3: #{custom_layer.1} parent=0 // pred_check_branch
    %7 = sbr.rel (0) target = $region5
  $region4: #{custom_layer.1} parent=0 // pred_region
    _
  $region5: #{custom_layer.1} parent=0 // pred_fallthru
    _
  %v8 = vld [vmem:[%s0] sm:$0xff]
  %v9 = vld [vmem:[%s0 + $0x8] sm:$0xff]
  %vm10 = vcmp.ne.f32.partialorder %v8, %v8
  %vm11 = vcmp.ne.f32.partialorder %v9, %v9
  %v12 = vsel %vm10, 0.0, %v8
  %v13 = vsel %vm11, 0.0, %v9
  %vm14 = vcmp.eq.f32.partialorder %v12, inf
  %vm15 = vcmp.eq.f32.partialorder %v13, inf
  %v16 = vsel %vm14, 1e+10, %v12
  %v17 = vsel %vm15, 1e+10, %v13
  %vm18 = vcmp.eq.f32.partialorder %v16, -inf
  %vm19 = vcmp.eq.f32.partialorder %v17, -inf
  %v20 = vsel %vm18, -1e+10, %v16
  %v21 = vsel %vm19, -1e+10, %v17
  %v22 = vmul.f32 %v20, 0.5
  %v23 = vmul.f32 %v21, 0.5
  %v24 = vtanh.pop %v22
  %v25 = vtanh.pop %v23
  %v26 = vmul.f32 %v20, %v24
  %v27 = vmul.f32 %v21, %v25
  %28 = vst [vmem:[%s1] sm:$0xff] %v26
  %29 = vst [vmem:[%s1 + $0x8] sm:$0xff] %v27
  // Predicated region
  $region6: #{custom_layer.1} parent=0 // pred_check
    _
  $region7: #{custom_layer.1} parent=0 // pred_check_branch
    %31 = sbr.rel (0) target = $region9
  $region8: #{custom_layer.1} parent=0 // pred_region
    _
  $region9: #{custom_layer.1} parent=0 // pred_fallthru
    _
  // Predicated region
  $region10: #{custom_layer.1} parent=0 // pred_check
    _
  $region11: #{custom_layer.1} parent=0 // pred_check_branch
    %33 = sbr.rel (0) target = $region13
  $region12: #{custom_layer.1} parent=0 // pred_region
    _
  $region13: #{custom_layer.1} parent=0 // pred_fallthru
    _

</llo_original>
